<compile_context>
chip_gen: v7x
topology: tpu7x:2x2x1
jax: 0.10.0
libtpu: 0.0.40
codegen_flags: <defaults>
</compile_context>

<pallas_src>
import functools

import jax
import jax.numpy as jnp
from jax import lax
from jax.experimental import pallas as pl
from jax.experimental.pallas import tpu as pltpu


def _round_up(x, m):
    return (x + m - 1) // m * m


@functools.lru_cache(maxsize=1)
def _tpu_generation():
    try:
        kind = jax.devices()[0].device_kind.lower()
    except Exception:
        return "default"
    if "v5 lite" in kind or "v5e" in kind or "v5litepod" in kind:
        return "v5e"
    if "v6" in kind:
        return "v6e"
    if "v7" in kind:
        return "v7x"
    return "default"


# Explicit scoped-VMEM request per generation (defaults: 16 MiB on v5e,
# 32 MiB on v6e/v7x; physical: 128 / 128 / 64 MiB).
_VMEM_LIMIT = {
    "v5e": 96 << 20,
    "v6e": 100 << 20,
    "v7x": 48 << 20,
    "default": 64 << 20,
}


def _pick_tn(N, cands, *, want_two_blocks):
    for t in cands:
        if N % t == 0 and (not want_two_blocks or N // t >= 2 or t == 128):
            return t
    return 128


def _pick_tk(K, cands):
    for t in cands:
        if K % t == 0:
            return t
    return 128


def _pick_tm_prefill(M, target):
    cands = []
    t = target
    while t >= 128:
        cands.append(t)
        t //= 2
    for t in cands:                      # prefer no row padding at all
        if M % t == 0:
            return t
    # Otherwise minimise wasted (padded) rows; larger tile wins ties.
    return min(cands, key=lambda t: (_round_up(M, t) - M, -t))


def _pick_tiles(M, N, K, dtype):
    """Per-generation tile selection.

    Decode  (M <= 256): pure weight-stream roofline -> grow the (tn x tk)
      weight tile to amortise per-grid-step overhead; on v7x keep N//tn >= 2
      so both TensorCores get work along the parallel N axis.
    Prefill (M >  256): pick tm/tn so tm*tn/(tm+tn) clears the generation's
      compute/HBM ridge (v5e ~240, v6e ~650, v7x ~310 flop/byte, bf16).
    The activation is kept VMEM-resident across the whole K axis (full-K
    BlockSpec) whenever the double-buffered footprint fits the VMEM budget.
    """
    gen = _tpu_generation()
    itemsize = jnp.dtype(dtype).itemsize
    pack = 8 * 4 // itemsize             # sublane packing: 8 rows f32, 16 bf16
    vmem_limit = _VMEM_LIMIT[gen]
    budget = int(0.85 * vmem_limit)

    if M <= 256:                         # decode / small batch
        tm = max(_round_up(M, pack), pack)
        if gen == "v7x":
            tn = _pick_tn(N, (512, 256, 128), want_two_blocks=True)
        else:
            tn = _pick_tn(N, (1024, 512, 256, 128), want_two_blocks=False)
        tk = _pick_tk(K, (4096, 2048, 1024, 512, 256, 128))
    else:                                # prefill / large batch
        if gen == "v5e":
            tm_target, tn_cands = 512, (512, 256, 128)
        elif gen == "v7x":
            tm_target, tn_cands = 512, (1024, 512, 256, 128)
        else:                            # v6e and unknown
            tm_target, tn_cands = 1024, (2048, 1024, 512, 256, 128)
        tm = _pick_tm_prefill(M, tm_target)
        tn = _pick_tn(N, tn_cands, want_two_blocks=(gen == "v7x"))
        tk = _pick_tk(K, (1024, 512, 256, 128))

    def footprint(full_k):
        a = 2 * tm * (K if full_k else tk) * itemsize   # double-buffered A
        w = 2 * tn * tk * itemsize                      # double-buffered W
        o = 2 * tm * tn * itemsize                      # double-buffered out
        acc = tm * tn * 4                               # f32 accumulator
        return a + w + o + acc

    # Prefer a VMEM-resident full-K activation (removes the N/tn x re-DMA).
    a_full_k = footprint(True) <= budget
    while footprint(a_full_k) > budget and tk > 128:
        tk //= 2
    while footprint(a_full_k) > budget and tn > 128:
        tn //= 2

    return tm, tn, tk, a_full_k, vmem_limit


# ----------------------------------------------------------------------------
# Fused path: state [M, K] @ w[expert_id].T with w [E, N, K], expert_id scalar.
# ----------------------------------------------------------------------------
def _moe_matmul_nk_kernel(eid_ref, a_ref, w_ref, o_ref, acc_ref, *, tk, a_full_k):
    # grid = (M//tm, N//tn, K//tk); K is the sequential reduction axis.
    # a: [tm, tk] (or [tm, K] when VMEM-resident); w: [tn, tk] in native layout.
    del eid_ref  # consumed only by the index_maps (expert selection)
    k = pl.program_id(2)

    @pl.when(k == 0)
    def _():
        acc_ref[...] = jnp.zeros_like(acc_ref)

    if a_full_k:
        a = a_ref[:, pl.ds(pl.multiple_of(k * tk, tk), tk)]
    else:
        a = a_ref[...]

    # A[tm,tk] @ W[tn,tk]^T: contract both last dims directly on the MXU.
    # TODO(synk): verify via pl.lower_as_mlir that Mosaic consumes the [tn,tk]
    # tile without an explicit XLU transpose on compute-bound prefill shapes.
    acc_ref[...] += lax.dot_general(
        a,
        w_ref[...],
        dimension_numbers=(((1,), (1,)), ((), ())),
        preferred_element_type=jnp.float32,
    )

    @pl.when(k == pl.num_programs(2) - 1)
    def _():
        o_ref[...] = acc_ref[...].astype(o_ref.dtype)


@functools.partial(
    jax.jit, static_argnames=("tm", "tn", "tk", "a_full_k", "vmem_limit"))
def _moe_matmul_nk(eid, state, w, *, tm, tn, tk, a_full_k, vmem_limit):
    M, K = state.shape
    _, N, _ = w.shape
    itemsize = jnp.dtype(state.dtype).itemsize

    if a_full_k:
        # Constant block index over (j, k) -> A stays VMEM-resident, no re-DMA.
        a_spec = pl.BlockSpec((tm, K), lambda i, j, k, eid_ref: (i, 0))
        a_bytes = M * K * itemsize
    else:
        a_spec = pl.BlockSpec((tm, tk), lambda i, j, k, eid_ref: (i, k))
        a_bytes = M * K * itemsize * (N // tn)

    kernel = functools.partial(_moe_matmul_nk_kernel, tk=tk, a_full_k=a_full_k)
    return pl.pallas_call(
        kernel,
        out_shape=jax.ShapeDtypeStruct((M, N), state.dtype),
        grid_spec=pltpu.PrefetchScalarGridSpec(
            num_scalar_prefetch=1,
            grid=(M // tm, N // tn, K // tk),
            in_specs=[
                a_spec,
                # Squeezed expert dim: gather the selected expert's tiles
                # straight out of the stacked [E, N, K] weight in HBM.
                pl.BlockSpec(
                    (None, tn, tk),
                    lambda i, j, k, eid_ref: (eid_ref[0], j, k),
                ),
            ],
            out_specs=pl.BlockSpec((tm, tn), lambda i, j, k, eid_ref: (i, j)),
            scratch_shapes=[pltpu.VMEM((tm, tn), jnp.float32)],
        ),
        compiler_params=pltpu.CompilerParams(
            dimension_semantics=("parallel", "parallel", "arbitrary"),
            vmem_limit_bytes=vmem_limit,
        ),
        cost_estimate=pl.CostEstimate(
            flops=2 * M * N * K,
            transcendentals=0,
            bytes_accessed=(a_bytes
                            + N * K * itemsize * (M // tm)
                            + M * N * itemsize),
        ),
    )(eid, state, w)


def moe_matmul_fused(state, expert_id, w):
    """state: [M, K], w: [E, N, K] -> [M, N] == state @ w[expert_id].T"""
    M, K = state.shape
    E, N, K2 = w.shape
    assert K == K2, f"K mismatch: {K} vs {K2}"
    assert N % 128 == 0 and K % 128 == 0, "N and K must be multiples of 128"
    # TODO(synk): ragged N/K (non-128-multiples) would need masked edge blocks.
    tm, tn, tk, a_full_k, vmem_limit = _pick_tiles(M, N, K, state.dtype)
    Mp = _round_up(M, tm)
    state_p = jnp.pad(state, ((0, Mp - M), (0, 0))) if Mp != M else state
    eid = jnp.asarray(expert_id, dtype=jnp.int32).reshape((1,))
    out = _moe_matmul_nk(eid, state_p, w, tm=tm, tn=tn, tk=tk,
                         a_full_k=a_full_k, vmem_limit=vmem_limit)
    return out[:M] if Mp != M else out


# ----------------------------------------------------------------------------
# Plain path: state [M, K] @ weight [K, N]  (set_weight + forward).
# ----------------------------------------------------------------------------
def _matmul_kn_kernel(a_ref, b_ref, o_ref, acc_ref, *, tk, a_full_k):
    k = pl.program_id(2)

    @pl.when(k == 0)
    def _():
        acc_ref[...] = jnp.zeros_like(acc_ref)

    if a_full_k:
        a = a_ref[:, pl.ds(pl.multiple_of(k * tk, tk), tk)]
    else:
        a = a_ref[...]

    acc_ref[...] += jnp.dot(a, b_ref[...], preferred_element_type=jnp.float32)

    @pl.when(k == pl.num_programs(2) - 1)
    def _():
        o_ref[...] = acc_ref[...].astype(o_ref.dtype)


@functools.partial(
    jax.jit, static_argnames=("tm", "tn", "tk", "a_full_k", "vmem_limit"))
def _matmul_kn(state, weight, *, tm, tn, tk, a_full_k, vmem_limit):
    M, K = state.shape
    _, N = weight.shape
    itemsize = jnp.dtype(state.dtype).itemsize

    if a_full_k:
        a_spec = pl.BlockSpec((tm, K), lambda i, j, k: (i, 0))
        a_bytes = M * K * itemsize
    else:
        a_spec = pl.BlockSpec((tm, tk), lambda i, j, k: (i, k))
        a_bytes = M * K * itemsize * (N // tn)

    kernel = functools.partial(_matmul_kn_kernel, tk=tk, a_full_k=a_full_k)
    return pl.pallas_call(
        kernel,
        out_shape=jax.ShapeDtypeStruct((M, N), state.dtype),
        grid_spec=pltpu.PrefetchScalarGridSpec(
            num_scalar_prefetch=0,
            grid=(M // tm, N // tn, K // tk),
            in_specs=[
                a_spec,
                pl.BlockSpec((tk, tn), lambda i, j, k: (k, j)),
            ],
            out_specs=pl.BlockSpec((tm, tn), lambda i, j, k: (i, j)),
            scratch_shapes=[pltpu.VMEM((tm, tn), jnp.float32)],
        ),
        compiler_params=pltpu.CompilerParams(
            dimension_semantics=("parallel", "parallel", "arbitrary"),
            vmem_limit_bytes=vmem_limit,
        ),
        cost_estimate=pl.CostEstimate(
            flops=2 * M * N * K,
            transcendentals=0,
            bytes_accessed=(a_bytes
                            + K * N * itemsize * (M // tm)
                            + M * N * itemsize),
        ),
    )(state, weight)


def moe_matmul(state, weight):
    """state: [M, K], weight: [K, N] -> [M, N] (== torch.matmul(state, weight))."""
    M, K = state.shape
    K2, N = weight.shape
    assert K == K2
    assert N % 128 == 0 and K % 128 == 0, "N and K must be multiples of 128"
    tm, tn, tk, a_full_k, vmem_limit = _pick_tiles(M, N, K, state.dtype)
    Mp = _round_up(M, tm)
    state_p = jnp.pad(state, ((0, Mp - M), (0, 0))) if Mp != M else state
    out = _matmul_kn(state_p, weight, tm=tm, tn=tn, tk=tk,
                     a_full_k=a_full_k, vmem_limit=vmem_limit)
    return out[:M] if Mp != M else out


# ----------------------------------------------------------------------------
# Module mirror.
# ----------------------------------------------------------------------------
class _ExpertWeightView:
    """Lazy stand-in for w[expert_id].T: calc() never materializes gather/T."""

    def __init__(self, stacked, expert_id):
        self.stacked = stacked        # [E, N, K]
        self.expert_id = expert_id


class MoeMatmul:
    """JAX mirror of the PyTorch MoeMatmul module."""

    def set_weight(self, w):
        self.weight = w               # [K, N]

    def calc(self, state, expert_id, w):
        # torch semantics: self.weight = w[expert_id].transpose(0, 1);
        # kept lazy -- the fused kernel selects + "transposes" in-kernel.
        self.weight = _ExpertWeightView(w, expert_id)
        return self.forward(state)

    def forward(self, state):
        w = self.weight
        if isinstance(w, _ExpertWeightView):
            return moe_matmul_fused(state, w.expert_id, w.stacked)
        return moe_matmul(state, w)


if __name__ == "__main__":
    key = jax.random.PRNGKey(0)
    k_state, k_w = jax.random.split(key)

    num_experts, M, K, N = 4, 16, 256, 256
    state = jax.random.normal(k_state, (M, K), dtype=jnp.float32)
    # Stacked expert weights, PyTorch layout [num_experts, N, K]
    w = jax.random.normal(k_w, (num_experts, N, K), dtype=jnp.float32) * 0.02

    mod = MoeMatmul()
    expert_id = 2
    out = jax.block_until_ready(mod.calc(state, expert_id, w))
    ref = state @ jnp.transpose(w[expert_id], (1, 0))
    assert out.shape == (M, N)
    assert jnp.allclose(out, ref, atol=5e-3, rtol=5e-3)

    # forward() after calc() reuses the fused (gather/transpose-free) path.
    out_fwd = jax.block_until_ready(mod.forward(state))
    assert jnp.allclose(out_fwd, ref, atol=5e-3, rtol=5e-3)

    # set_weight + forward path with an explicit [K, N] weight.
    mod.set_weight(jnp.transpose(w[0], (1, 0)))
    out2 = jax.block_until_ready(mod.forward(state))
    ref2 = state @ jnp.transpose(w[0], (1, 0))
    assert jnp.allclose(out2, ref2, atol=5e-3, rtol=5e-3)

    # bf16 inputs (recommended production dtype): halves HBM weight traffic,
    # accumulation stays in f32 inside the kernel.
    state_bf = state.astype(jnp.bfloat16)
    w_bf = w.astype(jnp.bfloat16)
    out_bf = jax.block_until_ready(mod.calc(state_bf, 1, w_bf))
    ref_bf = (state_bf.astype(jnp.float32)
              @ jnp.transpose(w_bf[1], (1, 0)).astype(jnp.float32))
    assert jnp.allclose(out_bf.astype(jnp.float32), ref_bf, atol=5e-2, rtol=5e-2)

    # Row count that is not a multiple of any tile (exercises the prefill
    # tm picker + minimal-padding path).
    M2 = 300
    state2 = jax.random.normal(k_state, (M2, K), dtype=jnp.float32)
    out3 = jax.block_until_ready(mod.calc(state2, 3, w))
    ref3 = state2 @ jnp.transpose(w[3], (1, 0))
    assert out3.shape == (M2, N)
    assert jnp.allclose(out3, ref3, atol=5e-3, rtol=5e-3)

    print("KERNEL_OK")
</pallas_src>

<mosaic_0001>
module attributes {stable_mosaic.version = 11 : i64} {
  func.func @_moe_matmul_nk_kernel(%arg0: i32, %arg1: i32, %arg2: i32, %arg3: memref<1xi32, #tpu.memory_space<smem>>, %arg4: memref<16x256xf32, #tpu.memory_space<vmem>>, %arg5: memref<1x256x256xf32, #tpu.memory_space<vmem>>, %arg6: memref<16x256xf32, #tpu.memory_space<vmem>>, %arg7: memref<16x256xf32, #tpu.memory_space<vmem>>) attributes {dimension_semantics = [#tpu.dimension_semantics<parallel>, #tpu.dimension_semantics<parallel>, #tpu.dimension_semantics<arbitrary>], iteration_bounds = array<i64: 1, 1, 1>, scalar_prefetch = 1 : i64, scratch_operands = 1 : i64, tpu.core_type = #tpu.core_type<tc>, window_params = [{transform_indices = @transform_0, window_bounds = array<i64: 16, 256>}, {transform_indices = @transform_1, window_bounds = array<i64: 1, 256, 256>}, {transform_indices = @transform_2, window_bounds = array<i64: 16, 256>}]} {
    %c0_i32 = arith.constant 0 : i32
    %0 = arith.cmpi eq, %arg2, %c0_i32 : i32
    %1 = arith.extui %0 : i1 to i32
    %c0_i32_0 = arith.constant 0 : i32
    %2 = arith.cmpi ne, %1, %c0_i32_0 : i32
    scf.if %2 {
      %cst_10 = arith.constant 0.000000e+00 : f32
      %16 = vector.broadcast %cst_10 : f32 to vector<16x256xf32>
      %c0_11 = arith.constant 0 : index
      %c0_12 = arith.constant 0 : index
      %17 = vector.load %arg7[%c0_11, %c0_12] : memref<16x256xf32, #tpu.memory_space<vmem>>, vector<16x256xf32>
      tpu.vector_store %arg7[%c0_11, %c0_12], %16 {strides = array<i32>} : memref<16x256xf32, #tpu.memory_space<vmem>>, vector<16x256xf32>,
    } else {
    }
    %c256_i32 = arith.constant 256 : i32
    %3 = arith.muli %arg2, %c256_i32 : i32
    %4 = tpu.assume_multiple %3, 256 : i32
    %c0 = arith.constant 0 : index
    %5 = arith.index_cast %4 : i32 to index
    %6 = vector.load %arg4[%c0, %5] : memref<16x256xf32, #tpu.memory_space<vmem>>, vector<16x256xf32>
    %c0_1 = arith.constant 0 : index
    %c0_2 = arith.constant 0 : index
    %7 = vector.load %arg7[%c0_1, %c0_2] : memref<16x256xf32, #tpu.memory_space<vmem>>, vector<16x256xf32>
    %c0_3 = arith.constant 0 : index
    %c0_4 = arith.constant 0 : index
    %c0_5 = arith.constant 0 : index
    %8 = vector.load %arg5[%c0_3, %c0_4, %c0_5] : memref<1x256x256xf32, #tpu.memory_space<vmem>>, vector<1x256x256xf32>
    %9 = vector.shape_cast %8 : vector<1x256x256xf32> to vector<256x256xf32>
    %cst = arith.constant dense<0.000000e+00> : vector<16x256xf32>
    %10 = tpu.matmul %6, %9, %cst {dimension_numbers = #tpu.dot_dimension_numbers<[1], [1], [0], [0], [0, 0, 1, 0], [], []>} : vector<16x256xf32>, vector<256x256xf32>, vector<16x256xf32> -> vector<16x256xf32>
    %11 = arith.addf %7, %10 : vector<16x256xf32>
    %c0_6 = arith.constant 0 : index
    %c0_7 = arith.constant 0 : index
    %12 = vector.load %arg7[%c0_6, %c0_7] : memref<16x256xf32, #tpu.memory_space<vmem>>, vector<16x256xf32>
    tpu.vector_store %arg7[%c0_6, %c0_7], %11 {strides = array<i32>} : memref<16x256xf32, #tpu.memory_space<vmem>>, vector<16x256xf32>,
    %c0_i32_8 = arith.constant 0 : i32
    %13 = arith.cmpi eq, %arg2, %c0_i32_8 : i32
    %14 = arith.extui %13 : i1 to i32
    %c0_i32_9 = arith.constant 0 : i32
    %15 = arith.cmpi ne, %14, %c0_i32_9 : i32
    scf.if %15 {
      %c0_10 = arith.constant 0 : index
      %c0_11 = arith.constant 0 : index
      %16 = vector.load %arg7[%c0_10, %c0_11] : memref<16x256xf32, #tpu.memory_space<vmem>>, vector<16x256xf32>
      %c0_12 = arith.constant 0 : index
      %c0_13 = arith.constant 0 : index
      %17 = vector.load %arg6[%c0_12, %c0_13] : memref<16x256xf32, #tpu.memory_space<vmem>>, vector<16x256xf32>
      tpu.vector_store %arg6[%c0_12, %c0_13], %16 {strides = array<i32>} : memref<16x256xf32, #tpu.memory_space<vmem>>, vector<16x256xf32>,
    } else {
    }
    return
  }
  func.func @transform_0(%arg0: i32, %arg1: i32, %arg2: i32, %arg3: memref<1xi32, #tpu.memory_space<smem>>) -> (i32, i32) {
    %c0_i32 = arith.constant 0 : i32
    %c0_i32_0 = arith.constant 0 : i32
    return %arg0, %c0_i32 : i32, i32
  }
  func.func @transform_1(%arg0: i32, %arg1: i32, %arg2: i32, %arg3: memref<1xi32, #tpu.memory_space<smem>>) -> (i32, i32, i32) {
    %c0 = arith.constant 0 : index
    %0 = memref.load %arg3[%c0] : memref<1xi32, #tpu.memory_space<smem>>
    %c0_i32 = arith.constant 0 : i32
    return %0, %arg1, %arg2 : i32, i32, i32
  }
  func.func @transform_2(%arg0: i32, %arg1: i32, %arg2: i32, %arg3: memref<1xi32, #tpu.memory_space<smem>>) -> (i32, i32) {
    %c0_i32 = arith.constant 0 : i32
    return %arg0, %arg1 : i32, i32
  }
}

</mosaic_0001>

<llo_original>
// kernel: _moe_matmul_nk.1
$region0: #{_moe_matmul_nk.1}
  #allocation0 [shape = 'u32[]', space=smem, size = 0x4, offset = 0x4, fixed_abs, tag = 'smem constant byte address 0x4 - core index']
  #allocation1 [shape = 'u32[144,128]{1,0:T(1,128)}', space=vmem, size = 0x12000, scoped, tag = 'internal scratch']
  #allocation2 [shape = 'f32[16,256]{1,0:T(8,128)}', space=vmem, size = 0x4000, scoped, tag = 'scratch operand']
  #allocation3 [shape = 's32[1]{0}', space=sflag, size = 0x4, scoped, tag = 'scoped memory for _moe_matmul_nk.1']
  #allocation4 [shape = 's32[1]{0:T(128)S(6)}', space=smem, size = 0x200, scoped, tag = 'prefetched SMEM operand 0']
  %s0 = inlined_call_operand.<no memory space> [shape: s32[1], index: 0, kind: input, shape index: {}]
  %s1 = inlined_call_operand.hbm [shape: f32[16,256], index: 1, kind: input, shape index: {}]
  %s2 = inlined_call_operand.hbm [shape: f32[4,256,256], index: 2, kind: input, shape index: {}]
  %s3 = inlined_call_operand.hbm [shape: f32[16,256], index: 3, kind: output, shape index: {}]
  %s4 = sld [smem:[#allocation0]]
  $region34: #{_moe_matmul_nk.1} parent=0
    _
  %s6 = ssub.s32 1, %s4
  %s7 = scalar_select 0, %s6, %s4
  %8 = sst [smem:[#allocation4]] %s0
  $region1: #{_moe_matmul_nk.1} parent=0
    #allocation5 [shape = 'u8[16384]{0}', space=vmem, size = 0x4000, scoped, tag = 'input window, operand 1, single buffered']
    #allocation6 [shape = 's32[1]{0}', space=sflag, size = 0x4, scoped, tag = 'scoped memory for _moe_matmul_nk.1']
    #allocation7 [shape = 's32[1]{0}', space=sflag, size = 0x4, scoped, tag = 'scoped memory for _moe_matmul_nk.1']
    #allocation8 [shape = 'u8[262144]{0}', space=vmem, size = 0x40000, scoped, tag = 'input window, operand 2, single buffered']
    #allocation9 [shape = 's32[1]{0}', space=sflag, size = 0x4, scoped, tag = 'scoped memory for _moe_matmul_nk.1']
    #allocation10 [shape = 'u8[16384]{0}', space=vmem, size = 0x4000, scoped, tag = 'output window, operand 0, single buffered']
    %9 = vsyncpa [#allocation6], 0
    %10 = vsyncpa [#allocation9], 0
    %11 = vsyncpa [#allocation7], 0
    // Predicated region
    $region2: #{_moe_matmul_nk.1} parent=1 // pred_check
      _
    $region3: #{_moe_matmul_nk.1} parent=1 // pred_check_branch
      %13 = sbr.rel (0) target = $region5
    $region4: #{_moe_matmul_nk.1} parent=1 // pred_region
      %s15 = ssub.s32 512, 512
      %16 = vsyncadd [#allocation6], %s15
      %s17 = sshll.u32 [#allocation5], 4
      %s18 = int_to_ptr.vmem [resolvable:$true] %s17
      %23 = dma.hbm_to_vmem [thread:$0]  %s1, 512, %s18, [#allocation6], 256, 256, 16
    $region5: #{_moe_matmul_nk.1} parent=1 // pred_fallthru
      _
    // Predicated region
    $region6: #{_moe_matmul_nk.1} parent=1 // pred_check
      _
    $region7: #{_moe_matmul_nk.1} parent=1 // pred_check_branch
      %25 = sbr.rel (0) target = $region9
    $region8: #{_moe_matmul_nk.1} parent=1 // pred_region
      %s26 = sld [smem:[#allocation4]]
      %s28 = ssub.s32 8192, 8192
      %29 = vsyncadd [#allocation9], %s28
      %s30 = smul.addr %s26, 64
      %s31 = smul.addr %s30, 128
      %s32 = scalar_lea.hbm %s2, %s31
      %s33 = sshll.u32 [#allocation8], 4
      %s34 = int_to_ptr.vmem [resolvable:$true] %s33
      %39 = dma.hbm_to_vmem [thread:$0]  %s32, 8192, %s34, [#allocation9], 256, 256, 16
    $region9: #{_moe_matmul_nk.1} parent=1 // pred_fallthru
      _
    // Predicated region
    $region10: #{_moe_matmul_nk.1} parent=1 // pred_check
      _
    $region11: #{_moe_matmul_nk.1} parent=1 // pred_check_branch
      %41 = sbr.rel (0) target = $region13
    $region12: #{_moe_matmul_nk.1} parent=1 // pred_region
      %42 = dma.done [#allocation6], 512
    $region13: #{_moe_matmul_nk.1} parent=1 // pred_fallthru
      _
    // Predicated region
    $region14: #{_moe_matmul_nk.1} parent=1 // pred_check
      _
    $region15: #{_moe_matmul_nk.1} parent=1 // pred_check_branch
      %44 = sbr.rel (0) target = $region17
    $region16: #{_moe_matmul_nk.1} parent=1 // pred_region
      %45 = dma.done [#allocation9], 8192
    $region17: #{_moe_matmul_nk.1} parent=1 // pred_fallthru
      _
    %s46 = sld [smem:[#allocation4]]
    %p47 = scmp.eq.s32.totalorder 0, 0
    // Predicated region
    $region18: #{_moe_matmul_nk.1} parent=1 // pred_check
      %p48 = pneg %p47
    $region19: #{_moe_matmul_nk.1} parent=1 // pred_check_branch
      %50 = sbr.rel (%p48) target = $region21
    $region20: #{_moe_matmul_nk.1} parent=1 // pred_region
      %51 = vst [vmem:[#allocation2] sm:$0xff] 0.0
      %52 = vst [vmem:[#allocation2 + $0x8] sm:$0xff] 0.0
      %53 = vst [vmem:[#allocation2 + $0x10] sm:$0xff] 0.0
      %54 = vst [vmem:[#allocation2 + $0x18] sm:$0xff] 0.0
    $region21: #{_moe_matmul_nk.1} parent=1 // pred_fallthru
      _
    %s55 = smul.u32 0, 256
    %s56 = sshra.s32 %s55, 7
    %s57 = sand.u32 %s55, 127
    %s58 = smul.addr %s56, 8
    %s59 = scalar_lea.vmem [#allocation5], %s58
    %v60 = vld [vmem:[%s59] sm:$0xff]
    %v61 = vld [vmem:[%s59 + $0x8] sm:$0xff]
    %v62 = vld [vmem:[%s59 + $0x10] sm:$0xff]
    %v63 = vld [vmem:[%s59 + $0x18] sm:$0xff]
    %v64 = vld [vmem:[#allocation2] sm:$0xff]
    %v65 = vld [vmem:[#allocation2 + $0x8] sm:$0xff]
    %v66 = vld [vmem:[#allocation2 + $0x10] sm:$0xff]
    %v67 = vld [vmem:[#allocation2 + $0x18] sm:$0xff]
    %v68 = vld [vmem:[#allocation8] sm:$0xff]
    %v69 = vld [vmem:[#allocation8 + $0x8] sm:$0xff]
    %v70 = vld [vmem:[#allocation8 + $0x10] sm:$0xff]
    %v71 = vld [vmem:[#allocation8 + $0x18] sm:$0xff]
    %v72 = vld [vmem:[#allocation8 + $0x20] sm:$0xff]
    %v73 = vld [vmem:[#allocation8 + $0x28] sm:$0xff]
    %v74 = vld [vmem:[#allocation8 + $0x30] sm:$0xff]
    %v75 = vld [vmem:[#allocation8 + $0x38] sm:$0xff]
    %v76 = vld [vmem:[#allocation8 + $0x40] sm:$0xff]
    %v77 = vld [vmem:[#allocation8 + $0x48] sm:$0xff]
    %v78 = vld [vmem:[#allocation8 + $0x50] sm:$0xff]
    %v79 = vld [vmem:[#allocation8 + $0x58] sm:$0xff]
    %v80 = vld [vmem:[#allocation8 + $0x60] sm:$0xff]
    %v81 = vld [vmem:[#allocation8 + $0x68] sm:$0xff]
    %v82 = vld [vmem:[#allocation8 + $0x70] sm:$0xff]
    %v83 = vld [vmem:[#allocation8 + $0x78] sm:$0xff]
    %v84 = vld [vmem:[#allocation8 + $0x80] sm:$0xff]
    %v85 = vld [vmem:[#allocation8 + $0x88] sm:$0xff]
    %v86 = vld [vmem:[#allocation8 + $0x90] sm:$0xff]
    %v87 = vld [vmem:[#allocation8 + $0x98] sm:$0xff]
    %v88 = vld [vmem:[#allocation8 + $0xa0] sm:$0xff]
    %v89 = vld [vmem:[#allocation8 + $0xa8] sm:$0xff]
    %v90 = vld [vmem:[#allocation8 + $0xb0] sm:$0xff]
    %v91 = vld [vmem:[#allocation8 + $0xb8] sm:$0xff]
    %v92 = vld [vmem:[#allocation8 + $0xc0] sm:$0xff]
    %v93 = vld [vmem:[#allocation8 + $0xc8] sm:$0xff]
    %v94 = vld [vmem:[#allocation8 + $0xd0] sm:$0xff]
    %v95 = vld [vmem:[#allocation8 + $0xd8] sm:$0xff]
    %v96 = vld [vmem:[#allocation8 + $0xe0] sm:$0xff]
    %v97 = vld [vmem:[#allocation8 + $0xe8] sm:$0xff]
    %v98 = vld [vmem:[#allocation8 + $0xf0] sm:$0xff]
    %v99 = vld [vmem:[#allocation8 + $0xf8] sm:$0xff]
    %v100 = vld [vmem:[#allocation8 + $0x100] sm:$0xff]
    %v101 = vld [vmem:[#allocation8 + $0x108] sm:$0xff]
    %v102 = vld [vmem:[#allocation8 + $0x110] sm:$0xff]
    %v103 = vld [vmem:[#allocation8 + $0x118] sm:$0xff]
    %v104 = vld [vmem:[#allocation8 + $0x120] sm:$0xff]
    %v105 = vld [vmem:[#allocation8 + $0x128] sm:$0xff]
    %v106 = vld [vmem:[#allocation8 + $0x130] sm:$0xff]
    %v107 = vld [vmem:[#allocation8 + $0x138] sm:$0xff]
    %v108 = vld [vmem:[#allocation8 + $0x140] sm:$0xff]
    %v109 = vld [vmem:[#allocation8 + $0x148] sm:$0xff]
    %v110 = vld [vmem:[#allocation8 + $0x150] sm:$0xff]
    %v111 = vld [vmem:[#allocation8 + $0x158] sm:$0xff]
    %v112 = vld [vmem:[#allocation8 + $0x160] sm:$0xff]
    %v113 = vld [vmem:[#allocation8 + $0x168] sm:$0xff]
    %v114 = vld [vmem:[#allocation8 + $0x170] sm:$0xff]
    %v115 = vld [vmem:[#allocation8 + $0x178] sm:$0xff]
    %v116 = vld [vmem:[#allocation8 + $0x180] sm:$0xff]
    %v117 = vld [vmem:[#allocation8 + $0x188] sm:$0xff]
    %v118 = vld [vmem:[#allocation8 + $0x190] sm:$0xff]
    %v119 = vld [vmem:[#allocation8 + $0x198] sm:$0xff]
    %v120 = vld [vmem:[#allocation8 + $0x1a0] sm:$0xff]
    %v121 = vld [vmem:[#allocation8 + $0x1a8] sm:$0xff]
    %v122 = vld [vmem:[#allocation8 + $0x1b0] sm:$0xff]
    %v123 = vld [vmem:[#allocation8 + $0x1b8] sm:$0xff]
    %v124 = vld [vmem:[#allocation8 + $0x1c0] sm:$0xff]
    %v125 = vld [vmem:[#allocation8 + $0x1c8] sm:$0xff]
    %v126 = vld [vmem:[#allocation8 + $0x1d0] sm:$0xff]
    %v127 = vld [vmem:[#allocation8 + $0x1d8] sm:$0xff]
    %v128 = vld [vmem:[#allocation8 + $0x1e0] sm:$0xff]
    %v129 = vld [vmem:[#allocation8 + $0x1e8] sm:$0xff]
    %v130 = vld [vmem:[#allocation8 + $0x1f0] sm:$0xff]
    %v131 = vld [vmem:[#allocation8 + $0x1f8] sm:$0xff]
    %132 = vmatprep.subr.mxu0 %v69
    %133 = vmatpush1.xpose.msra.mxu0 %v68
    %134 = vmatprep.subr.mxu0 %v71
    %135 = vmatpush1.xpose.msra.mxu0 %v70
    %136 = vmatprep.subr.mxu0 %v73
    %137 = vmatpush1.xpose.msra.mxu0 %v72
    %138 = vmatprep.subr.mxu0 %v75
    %139 = vmatpush1.xpose.msra.mxu0 %v74
    %140 = vmatprep.subr.mxu0 %v77
    %141 = vmatpush1.xpose.msra.mxu0 %v76
    %142 = vmatprep.subr.mxu0 %v79
    %143 = vmatpush1.xpose.msra.mxu0 %v78
    %144 = vmatprep.subr.mxu0 %v81
    %145 = vmatpush1.xpose.msra.mxu0 %v80
    %146 = vmatprep.subr.mxu0 %v83
    %147 = vmatpush1.xpose.msra.mxu0 %v82
    %148 = vmatprep.subr.mxu0 %v85
    %149 = vmatpush1.xpose.msra.mxu0 %v84
    %150 = vmatprep.subr.mxu0 %v87
    %151 = vmatpush1.xpose.msra.mxu0 %v86
    %152 = vmatprep.subr.mxu0 %v89
    %153 = vmatpush1.xpose.msra.mxu0 %v88
    %154 = vmatprep.subr.mxu0 %v91
    %155 = vmatpush1.xpose.msra.mxu0 %v90
    %156 = vmatprep.subr.mxu0 %v93
    %157 = vmatpush1.xpose.msra.mxu0 %v92
    %158 = vmatprep.subr.mxu0 %v95
    %159 = vmatpush1.xpose.msra.mxu0 %v94
    %160 = vmatprep.subr.mxu0 %v97
    %161 = vmatpush1.xpose.msra.mxu0 %v96
    %162 = vmatprep.subr.mxu0 %v99
    %163 = vmatpush1.xpose.msra.mxu0 %v98
    %164 = vmatprep.subr.mxu0 %v101
    %165 = vmatpush1.xpose.msra.mxu0 %v100
    %166 = vmatprep.subr.mxu0 %v103
    %167 = vmatpush1.xpose.msra.mxu0 %v102
    %168 = vmatprep.subr.mxu0 %v105
    %169 = vmatpush1.xpose.msra.mxu0 %v104
    %170 = vmatprep.subr.mxu0 %v107
    %171 = vmatpush1.xpose.msra.mxu0 %v106
    %172 = vmatprep.subr.mxu0 %v109
    %173 = vmatpush1.xpose.msra.mxu0 %v108
    %174 = vmatprep.subr.mxu0 %v111
    %175 = vmatpush1.xpose.msra.mxu0 %v110
    %176 = vmatprep.subr.mxu0 %v113
    %177 = vmatpush1.xpose.msra.mxu0 %v112
    %178 = vmatprep.subr.mxu0 %v115
    %179 = vmatpush1.xpose.msra.mxu0 %v114
    %180 = vmatprep.subr.mxu0 %v117
    %181 = vmatpush1.xpose.msra.mxu0 %v116
    %182 = vmatprep.subr.mxu0 %v119
    %183 = vmatpush1.xpose.msra.mxu0 %v118
    %184 = vmatprep.subr.mxu0 %v121
    %185 = vmatpush1.xpose.msra.mxu0 %v120
    %186 = vmatprep.subr.mxu0 %v123
    %187 = vmatpush1.xpose.msra.mxu0 %v122
    %188 = vmatprep.subr.mxu0 %v125
    %189 = vmatpush1.xpose.msra.mxu0 %v124
    %190 = vmatprep.subr.mxu0 %v127
    %191 = vmatpush1.xpose.msra.mxu0 %v126
    %192 = vmatprep.subr.mxu0 %v129
    %193 = vmatpush1.xpose.msra.mxu0 %v128
    %194 = vmatprep.subr.mxu0 %v131
    %195 = vmatpush1.xpose.msra.mxu0 %v130
    %196 = vmatprep.mubr.f32.mxu0 %v61
    %197 = vmatmul.mubr.f32.gmra.mrb[0].mxu0 %v60
    %v198 = vpop.f32.mrb[0].mxu0
    %v199 = vadd.f32 0.0, %v198
    %v200 = vpop.f32.mrb[0].mxu0
    %v201 = vadd.f32 0.0, %v200
    %202 = vmatprep.mubr.f32.mxu0 %v63
    %203 = vmatmul.mubr.f32.gmra.mrb[0].mxu0 %v62
    %v204 = vpop.f32.mrb[0].mxu0
    %v205 = vadd.f32 0.0, %v204
    %v206 = vpop.f32.mrb[0].mxu0
    %v207 = vadd.f32 0.0, %v206
    %208 = vdwg.mxu0
    %v209 = vadd.f32 %v64, %v199
    %v210 = vadd.f32 %v65, %v201
    %v211 = vadd.f32 %v66, %v205
    %v212 = vadd.f32 %v67, %v207
    %213 = vst [vmem:[#allocation2] sm:$0xff] %v209
    %214 = vst [vmem:[#allocation2 + $0x8] sm:$0xff] %v210
    %215 = vst [vmem:[#allocation2 + $0x10] sm:$0xff] %v211
    %216 = vst [vmem:[#allocation2 + $0x18] sm:$0xff] %v212
    // Predicated region
    $region22: #{_moe_matmul_nk.1} parent=1 // pred_check
      %p217 = pneg %p47
    $region23: #{_moe_matmul_nk.1} parent=1 // pred_check_branch
      %219 = sbr.rel (%p217) target = $region25
    $region24: #{_moe_matmul_nk.1} parent=1 // pred_region
      %v220 = vld [vmem:[#allocation2] sm:$0xff]
      %v221 = vld [vmem:[#allocation2 + $0x8] sm:$0xff]
      %v222 = vld [vmem:[#allocation2 + $0x10] sm:$0xff]
      %v223 = vld [vmem:[#allocation2 + $0x18] sm:$0xff]
      %224 = vst [vmem:[#allocation10] sm:$0xff] %v220
      %225 = vst [vmem:[#allocation10 + $0x8] sm:$0xff] %v221
      %226 = vst [vmem:[#allocation10 + $0x10] sm:$0xff] %v222
      %227 = vst [vmem:[#allocation10 + $0x18] sm:$0xff] %v223
    $region25: #{_moe_matmul_nk.1} parent=1 // pred_fallthru
      _
    // Predicated region
    $region26: #{_moe_matmul_nk.1} parent=1 // pred_check
      _
    $region27: #{_moe_matmul_nk.1} parent=1 // pred_check_branch
      %229 = sbr.rel (0) target = $region29
    $region28: #{_moe_matmul_nk.1} parent=1 // pred_region
      %s231 = ssub.s32 512, 512
      %232 = vsyncadd [#allocation7], %s231
      %s233 = sshll.u32 [#allocation10], 4
      %s234 = int_to_ptr.vmem [resolvable:$true] %s233
      %239 = dma.vmem_to_hbm [thread:$0]  %s234, 512, %s3, [#allocation7], 256, 256, 16
    $region29: #{_moe_matmul_nk.1} parent=1 // pred_fallthru
      _
    // Predicated region
    $region30: #{_moe_matmul_nk.1} parent=1 // pred_check
      _
    $region31: #{_moe_matmul_nk.1} parent=1 // pred_check_branch
      %241 = sbr.rel (0) target = $region33
    $region32: #{_moe_matmul_nk.1} parent=1 // pred_region
      %242 = dma.done [#allocation7], 512
    $region33: #{_moe_matmul_nk.1} parent=1 // pred_fallthru
      _
    %243 = vsyncpa [#allocation6], 1
    %244 = vsyncpa [#allocation9], 1
    %245 = vsyncpa [#allocation7], 1

</llo_original>
